<compile_context>
chip_gen: v7x
topology: tpu7x:2x2x1
jax: 0.10.0
libtpu: 0.0.40
codegen_flags: <defaults>
</compile_context>

<pallas_src>
import jax
import jax.numpy as jnp
from jax import lax
from jax.experimental import pallas as pl
from jax.experimental.pallas import tpu as pltpu

EPS = 1e-5
NEG_SLOPE = 0.2


def _round_up(x, m):
    return (x + m - 1) // m * m


def _make_dblock_kernel(taps, th, wo, t_tiles, cout, cout_pad, eps, neg_slope):
    tp = th * wo              # spatial positions per grid step
    p_total = t_tiles * tp    # total spatial positions (Ho*Wo)

    def kernel(x_ref, w_ref, o_ref, sum_ref, sqs_ref):
        # x_ref:  (1, H2, W2, Cs)      space-to-depth'd padded sample
        #                              (VMEM-resident across the row-tile axis)
        # w_ref:  (n_taps, Cs, Cout_pad)
        # o_ref:  (1, Cout, T, TP)     raw conv accumulated across row tiles; the
        #                              fused InstanceNorm+LeakyReLU epilogue is
        #                              applied in place on the last row tile
        # sum_ref, sqs_ref: (Cout, 1)  streaming per-channel sum / sum-of-squares
        t = pl.program_id(1)

        @pl.when(t == 0)
        def _init():
            sum_ref[...] = jnp.zeros_like(sum_ref)
            sqs_ref[...] = jnp.zeros_like(sqs_ref)

        r0 = pl.multiple_of(t * th, th)

        # Conv for this tile of `th` output rows: sum of shifted-window matmuls
        # over the (4/s)^2 taps; contraction dim = s*s*Cin, output dim padded to
        # a multiple of 128 (lane/MXU dense).
        acc = jnp.zeros((tp, cout_pad), jnp.float32)
        for i, (dh, dw) in enumerate(taps):
            win = x_ref[0, pl.ds(r0 + dh, th), pl.ds(dw, wo), :]   # (th, wo, Cs)
            win = win.reshape(tp, win.shape[-1])                   # (tp, Cs)
            acc = acc + jnp.dot(win, w_ref[i],
                                preferred_element_type=jnp.float32)

        # (tp, Cout_pad) -> channel-major (Cout, tp): matches the NCHW output
        # element order, so no transpose is needed outside the kernel.
        yt = acc.T[:cout]                                          # (Cout, tp)
        o_ref[0, :, pl.ds(t, 1), :] = yt.reshape(cout, 1, tp)

        # Streaming InstanceNorm statistics (hidden under matmul / DMA).
        sum_ref[...] += jnp.sum(yt, axis=1, keepdims=True)
        sqs_ref[...] += jnp.sum(yt * yt, axis=1, keepdims=True)

        # Epilogue on the last row tile: normalize + LeakyReLU the whole
        # VMEM-resident per-sample output block in place.
        @pl.when(t == pl.num_programs(1) - 1)
        def _finalize():
            inv_p = 1.0 / float(p_total)
            mean = sum_ref[...] * inv_p                            # (Cout, 1)
            var = jnp.maximum(sqs_ref[...] * inv_p - mean * mean, 0.0)
            inv_std = lax.rsqrt(var + eps)                         # (Cout, 1)
            y = o_ref[0]                                           # (Cout, T, TP)
            y = (y - mean[:, :, None]) * inv_std[:, :, None]
            o_ref[0] = jnp.where(y >= 0.0, y, neg_slope * y)

    return kernel


def dblock_forward(x, weight, bias=None, stride=2):
    """Fused DBlock forward.

    x:      (N, Cin, H, W) float32, NCHW (as in PyTorch)
    weight: (Cout, Cin, 4, 4)
    bias:   (Cout,) — accepted but unused: a per-channel constant is exactly
            cancelled by the affine=False InstanceNorm that follows the conv.
    Returns (N, Cout, Ho, Wo) float32 (NCHW).
    """
    k = 4
    s = int(stride)
    N, Cin, H, W = x.shape
    Cout = weight.shape[0]
    del bias  # mathematically cancelled by InstanceNorm (affine=False)

    # TODO(synk): only strides with k % stride == 0 (1, 2, 4) are supported by the
    # space-to-depth decomposition; CycleGAN's DBlock uses stride 1 and 2.
    assert k % s == 0, "stride must divide the kernel size (4)"
    k2 = k // s
    n_taps = k2 * k2
    Cs = s * s * Cin

    # ---- host-side glue (plain JAX): reflect pad + space-to-depth ----------
    x = x.astype(jnp.float32)
    x_pad = jnp.pad(x, ((0, 0), (0, 0), (1, 1), (1, 1)), mode="reflect")
    Hp, Wp = H + 2, W + 2
    Ho = (Hp - k) // s + 1
    Wo = (Wp - k) // s + 1

    H2 = -(-Hp // s)
    W2 = -(-Wp // s)
    x_pad = jnp.pad(x_pad, ((0, 0), (0, 0), (0, H2 * s - Hp), (0, W2 * s - Wp)))
    # NCHW -> (N, H2, W2, s*s*Cin), sub-pixel channel order (ph, pw, cin)
    xs = x_pad.reshape(N, Cin, H2, s, W2, s)
    xs = xs.transpose(0, 2, 4, 3, 5, 1).reshape(N, H2, W2, Cs)

    # Weights -> one (Cs, Cout_pad) matrix per (dh, dw) tap, Cout zero-padded to
    # a multiple of 128 (lane-dense MXU N dim). kh = dh*s + ph, kw = dw*s + pw.
    Cout_pad = _round_up(Cout, 128)
    wt = weight.astype(jnp.float32).transpose(2, 3, 1, 0)         # (kh, kw, Cin, Cout)
    wt = wt.reshape(k2, s, k2, s, Cin, Cout)                      # (dh, ph, dw, pw, Cin, Cout)
    wt = wt.transpose(0, 2, 1, 3, 4, 5).reshape(n_taps, Cs, Cout)
    wt = jnp.pad(wt, ((0, 0), (0, 0), (0, Cout_pad - Cout)))

    taps = tuple((dh, dw) for dh in range(k2) for dw in range(k2))

    # ---- row tiling: TH output rows per grid step ---------------------------
    max_tp = 2048                       # ~1 MiB f32 tile accumulator at Cout_pad=128
    TH = 1
    for d in range(1, Ho + 1):
        if Ho % d == 0 and d * Wo <= max_tp:
            TH = d
    T = Ho // TH
    TP = TH * Wo

    kernel = _make_dblock_kernel(taps, TH, Wo, T, Cout, Cout_pad, EPS, NEG_SLOPE)

    # Rough VMEM budget (with (8,128) tile padding); raise the scoped limit only
    # when the default would not be enough (no-op for small shapes).
    def _tile_bytes(shape):
        p = list(shape)
        p[-1] = _round_up(p[-1], 128)
        p[-2] = _round_up(p[-2], 8)
        n = 1
        for v in p:
            n *= v
        return 4 * n

    vmem_needed = (2 * _tile_bytes((H2, W2, Cs))       # resident input (2 buffers)
                   + 2 * _tile_bytes((Cout, T, TP))    # resident output block
                   + _tile_bytes((n_taps * Cs, Cout_pad))
                   + 4 * _tile_bytes((TP, Cout_pad)))  # per-tile working set
    compiler_kwargs = dict(dimension_semantics=("parallel", "arbitrary"))
    if vmem_needed > 30 * 1024 * 1024:
        # Stopgap for very large samples on v5e/v6e; on v7x (64 MiB physical VMEM)
        # switch to bf16 activations or halo-DMA row tiling of the input instead.
        compiler_kwargs["vmem_limit_bytes"] = int(min(56 * 1024 * 1024,
                                                      1.3 * vmem_needed))

    P = Ho * Wo
    cost = pl.CostEstimate(
        flops=int(2 * N * P * (k * k * Cin) * Cout_pad),
        transcendentals=int(N * Cout),
        bytes_accessed=int(xs.size * 4 + wt.size * 4 + N * Cout * P * 4),
    )

    out = pl.pallas_call(
        kernel,
        out_shape=jax.ShapeDtypeStruct((N, Cout, T, TP), jnp.float32),
        grid_spec=pltpu.PrefetchScalarGridSpec(
            num_scalar_prefetch=0,
            grid=(N, T),
            in_specs=[
                # whole space-to-depth'd sample, resident across the row-tile axis
                pl.BlockSpec((1, H2, W2, Cs), lambda n, t: (n, 0, 0, 0)),
                pl.BlockSpec((n_taps, Cs, Cout_pad), lambda n, t: (0, 0, 0)),
            ],
            out_specs=pl.BlockSpec((1, Cout, T, TP), lambda n, t: (n, 0, 0, 0)),
            scratch_shapes=[pltpu.VMEM((Cout, 1), jnp.float32),
                            pltpu.VMEM((Cout, 1), jnp.float32)],
        ),
        compiler_params=pltpu.CompilerParams(**compiler_kwargs),
        cost_estimate=cost,
    )(xs, wt)

    # Element order is already NCHW -> pure reshape, no transpose / extra HBM pass.
    return out.reshape(N, Cout, Ho, Wo)


def _dblock_reference(x, weight, bias, stride):
    """Pure-JAX reference (reflect pad + im2col conv + InstanceNorm + LeakyReLU)."""
    k = 4
    N, Cin, H, W = x.shape
    Cout = weight.shape[0]
    x_pad = jnp.pad(x, ((0, 0), (0, 0), (1, 1), (1, 1)), mode="reflect")
    Hp, Wp = H + 2, W + 2
    Ho = (Hp - k) // stride + 1
    Wo = (Wp - k) // stride + 1
    ih = jnp.arange(Ho) * stride
    iw = jnp.arange(Wo) * stride
    p = x_pad[:, :, ih[:, None] + jnp.arange(k)[None, :], :]
    p = p[:, :, :, :, iw[:, None] + jnp.arange(k)[None, :]]
    p = p.transpose(0, 2, 4, 1, 3, 5).reshape(N, Ho * Wo, Cin * k * k)
    w = weight.reshape(Cout, Cin * k * k).T
    y = jnp.einsum("npk,kc->npc", p, w,
                   precision=jax.lax.Precision.HIGHEST) + bias[None, None, :]
    mean = y.mean(axis=1, keepdims=True)
    var = ((y - mean) ** 2).mean(axis=1, keepdims=True)
    y = (y - mean) * lax.rsqrt(var + EPS)
    y = jnp.where(y >= 0, y, NEG_SLOPE * y)
    return y.reshape(N, Ho, Wo, Cout).transpose(0, 3, 1, 2)


if __name__ == "__main__":
    # Small shapes consistent with DBlock(in_channels=4, out_channels=8, stride=2)
    N, Cin, H, W = 2, 4, 16, 16
    Cout, stride = 8, 2

    key = jax.random.PRNGKey(0)
    kx, kw, kb = jax.random.split(key, 3)
    x = jax.random.normal(kx, (N, Cin, H, W), dtype=jnp.float32)
    weight = jax.random.normal(kw, (Cout, Cin, 4, 4), dtype=jnp.float32) * 0.1
    bias = jax.random.normal(kb, (Cout,), dtype=jnp.float32) * 0.1

    y = dblock_forward(x, weight, bias, stride)
    jax.block_until_ready(y)
    assert y.shape == (N, Cout, H // stride, W // stride), y.shape

    # Correctness check against the pure-JAX reference.
    y_ref = _dblock_reference(x, weight, bias, stride)
    err = float(jnp.max(jnp.abs(y - y_ref)))
    assert err < 1e-3, f"max abs err {err}"

    print("KERNEL_OK")
</pallas_src>

<mosaic_0001>
module attributes {stable_mosaic.version = 11 : i64} {
  func.func @kernel(%arg0: i32, %arg1: i32, %arg2: memref<1x9x9x16xf32, #tpu.memory_space<vmem>>, %arg3: memref<4x16x128xf32, #tpu.memory_space<vmem>>, %arg4: memref<1x8x1x64xf32, #tpu.memory_space<vmem>>, %arg5: memref<8x1xf32, #tpu.memory_space<vmem>>, %arg6: memref<8x1xf32, #tpu.memory_space<vmem>>) attributes {dimension_semantics = [#tpu.dimension_semantics<parallel>, #tpu.dimension_semantics<arbitrary>], iteration_bounds = array<i64: 2, 1>, scalar_prefetch = 0 : i64, scratch_operands = 2 : i64, tpu.core_type = #tpu.core_type<tc>, window_params = [{transform_indices = @transform_0, window_bounds = array<i64: 1, 9, 9, 16>}, {pipeline_mode = #tpu.pipeline_mode<synchronous>, transform_indices = @transform_1, window_bounds = array<i64: 4, 16, 128>}, {transform_indices = @transform_2, window_bounds = array<i64: 1, 8, 1, 64>}]} {
    %c0_i32 = arith.constant 0 : i32
    %0 = arith.cmpi eq, %arg1, %c0_i32 : i32
    %1 = arith.extui %0 : i1 to i32
    %c0_i32_0 = arith.constant 0 : i32
    %2 = arith.cmpi ne, %1, %c0_i32_0 : i32
    scf.if %2 {
      %cst_43 = arith.constant 0.000000e+00 : f32
      %63 = vector.broadcast %cst_43 : f32 to vector<8x1xf32>
      %c0_44 = arith.constant 0 : index
      %c0_45 = arith.constant 0 : index
      %64 = vector.load %arg5[%c0_44, %c0_45] : memref<8x1xf32, #tpu.memory_space<vmem>>, vector<8x1xf32>
      tpu.vector_store %arg5[%c0_44, %c0_45], %63 {strides = array<i32>} : memref<8x1xf32, #tpu.memory_space<vmem>>, vector<8x1xf32>,
      %cst_46 = arith.constant 0.000000e+00 : f32
      %65 = vector.broadcast %cst_46 : f32 to vector<8x1xf32>
      %c0_47 = arith.constant 0 : index
      %c0_48 = arith.constant 0 : index
      %66 = vector.load %arg6[%c0_47, %c0_48] : memref<8x1xf32, #tpu.memory_space<vmem>>, vector<8x1xf32>
      tpu.vector_store %arg6[%c0_47, %c0_48], %65 {strides = array<i32>} : memref<8x1xf32, #tpu.memory_space<vmem>>, vector<8x1xf32>,
    } else {
    }
    %c8_i32 = arith.constant 8 : i32
    %3 = arith.muli %arg1, %c8_i32 : i32
    %4 = tpu.assume_multiple %3, 8 : i32
    %cst = arith.constant 0.000000e+00 : f32
    %5 = vector.broadcast %cst : f32 to vector<64x128xf32>
    %c0_i32_1 = arith.constant 0 : i32
    %6 = arith.addi %4, %c0_i32_1 : i32
    %c0 = arith.constant 0 : index
    %7 = arith.index_cast %6 : i32 to index
    %c0_2 = arith.constant 0 : index
    %c0_3 = arith.constant 0 : index
    %8 = vector.load %arg2[%c0, %7, %c0_2, %c0_3] : memref<1x9x9x16xf32, #tpu.memory_space<vmem>>, vector<1x8x8x16xf32>
    %9 = vector.shape_cast %8 : vector<1x8x8x16xf32> to vector<8x8x16xf32>
    %10 = vector.shape_cast %9 : vector<8x8x16xf32> to vector<64x16xf32>
    %c0_4 = arith.constant 0 : index
    %c0_5 = arith.constant 0 : index
    %c0_6 = arith.constant 0 : index
    %11 = vector.load %arg3[%c0_4, %c0_5, %c0_6] : memref<4x16x128xf32, #tpu.memory_space<vmem>>, vector<1x16x128xf32>
    %12 = vector.shape_cast %11 : vector<1x16x128xf32> to vector<16x128xf32>
    %cst_7 = arith.constant dense<0.000000e+00> : vector<64x128xf32>
    %13 = tpu.matmul %10, %12, %cst_7 {dimension_numbers = #tpu.dot_dimension_numbers<[1], [0], [0], [1], [0, 0, 1, 1], [], []>} : vector<64x16xf32>, vector<16x128xf32>, vector<64x128xf32> -> vector<64x128xf32>
    %14 = arith.addf %5, %13 : vector<64x128xf32>
    %c0_i32_8 = arith.constant 0 : i32
    %15 = arith.addi %4, %c0_i32_8 : i32
    %c0_9 = arith.constant 0 : index
    %16 = arith.index_cast %15 : i32 to index
    %c1 = arith.constant 1 : index
    %c0_10 = arith.constant 0 : index
    %17 = vector.load %arg2[%c0_9, %16, %c1, %c0_10] : memref<1x9x9x16xf32, #tpu.memory_space<vmem>>, vector<1x8x8x16xf32>
    %18 = vector.shape_cast %17 : vector<1x8x8x16xf32> to vector<8x8x16xf32>
    %19 = vector.shape_cast %18 : vector<8x8x16xf32> to vector<64x16xf32>
    %c1_11 = arith.constant 1 : index
    %c0_12 = arith.constant 0 : index
    %c0_13 = arith.constant 0 : index
    %20 = vector.load %arg3[%c1_11, %c0_12, %c0_13] : memref<4x16x128xf32, #tpu.memory_space<vmem>>, vector<1x16x128xf32>
    %21 = vector.shape_cast %20 : vector<1x16x128xf32> to vector<16x128xf32>
    %cst_14 = arith.constant dense<0.000000e+00> : vector<64x128xf32>
    %22 = tpu.matmul %19, %21, %cst_14 {dimension_numbers = #tpu.dot_dimension_numbers<[1], [0], [0], [1], [0, 0, 1, 1], [], []>} : vector<64x16xf32>, vector<16x128xf32>, vector<64x128xf32> -> vector<64x128xf32>
    %23 = arith.addf %14, %22 : vector<64x128xf32>
    %c1_i32 = arith.constant 1 : i32
    %24 = arith.addi %4, %c1_i32 : i32
    %c0_15 = arith.constant 0 : index
    %25 = arith.index_cast %24 : i32 to index
    %c0_16 = arith.constant 0 : index
    %c0_17 = arith.constant 0 : index
    %26 = vector.load %arg2[%c0_15, %25, %c0_16, %c0_17] : memref<1x9x9x16xf32, #tpu.memory_space<vmem>>, vector<1x8x8x16xf32>
    %27 = vector.shape_cast %26 : vector<1x8x8x16xf32> to vector<8x8x16xf32>
    %28 = vector.shape_cast %27 : vector<8x8x16xf32> to vector<64x16xf32>
    %c2 = arith.constant 2 : index
    %c0_18 = arith.constant 0 : index
    %c0_19 = arith.constant 0 : index
    %29 = vector.load %arg3[%c2, %c0_18, %c0_19] : memref<4x16x128xf32, #tpu.memory_space<vmem>>, vector<1x16x128xf32>
    %30 = vector.shape_cast %29 : vector<1x16x128xf32> to vector<16x128xf32>
    %cst_20 = arith.constant dense<0.000000e+00> : vector<64x128xf32>
    %31 = tpu.matmul %28, %30, %cst_20 {dimension_numbers = #tpu.dot_dimension_numbers<[1], [0], [0], [1], [0, 0, 1, 1], [], []>} : vector<64x16xf32>, vector<16x128xf32>, vector<64x128xf32> -> vector<64x128xf32>
    %32 = arith.addf %23, %31 : vector<64x128xf32>
    %c1_i32_21 = arith.constant 1 : i32
    %33 = arith.addi %4, %c1_i32_21 : i32
    %c0_22 = arith.constant 0 : index
    %34 = arith.index_cast %33 : i32 to index
    %c1_23 = arith.constant 1 : index
    %c0_24 = arith.constant 0 : index
    %35 = vector.load %arg2[%c0_22, %34, %c1_23, %c0_24] : memref<1x9x9x16xf32, #tpu.memory_space<vmem>>, vector<1x8x8x16xf32>
    %36 = vector.shape_cast %35 : vector<1x8x8x16xf32> to vector<8x8x16xf32>
    %37 = vector.shape_cast %36 : vector<8x8x16xf32> to vector<64x16xf32>
    %c3 = arith.constant 3 : index
    %c0_25 = arith.constant 0 : index
    %c0_26 = arith.constant 0 : index
    %38 = vector.load %arg3[%c3, %c0_25, %c0_26] : memref<4x16x128xf32, #tpu.memory_space<vmem>>, vector<1x16x128xf32>
    %39 = vector.shape_cast %38 : vector<1x16x128xf32> to vector<16x128xf32>
    %cst_27 = arith.constant dense<0.000000e+00> : vector<64x128xf32>
    %40 = tpu.matmul %37, %39, %cst_27 {dimension_numbers = #tpu.dot_dimension_numbers<[1], [0], [0], [1], [0, 0, 1, 1], [], []>} : vector<64x16xf32>, vector<16x128xf32>, vector<64x128xf32> -> vector<64x128xf32>
    %41 = arith.addf %32, %40 : vector<64x128xf32>
    %42 = tpu.transpose %41, [1, 0] : vector<64x128xf32> -> vector<128x64xf32>
    %43 = vector.extract_strided_slice %42 {offsets = [0, 0], sizes = [8, 64], strides = [1, 1]} : vector<128x64xf32> to vector<8x64xf32>
    %44 = vector.shape_cast %43 : vector<8x64xf32> to vector<8x1x64xf32>
    %c0_28 = arith.constant 0 : index
    %c0_29 = arith.constant 0 : index
    %45 = arith.index_cast %arg1 : i32 to index
    %c0_30 = arith.constant 0 : index
    %46 = vector.load %arg4[%c0_28, %c0_29, %45, %c0_30] : memref<1x8x1x64xf32, #tpu.memory_space<vmem>>, vector<1x8x1x64xf32>
    %47 = vector.shape_cast %46 : vector<1x8x1x64xf32> to vector<8x1x64xf32>
    %48 = vector.shape_cast %44 : vector<8x1x64xf32> to vector<1x8x1x64xf32>
    tpu.vector_store %arg4[%c0_28, %c0_29, %45, %c0_30], %48 {strides = array<i32>} : memref<1x8x1x64xf32, #tpu.memory_space<vmem>>, vector<1x8x1x64xf32>,
    %c0_31 = arith.constant 0 : index
    %c0_32 = arith.constant 0 : index
    %49 = vector.load %arg5[%c0_31, %c0_32] : memref<8x1xf32, #tpu.memory_space<vmem>>, vector<8x1xf32>
    %cst_33 = arith.constant dense<0.000000e+00> : vector<8xf32>
    %50 = vector.multi_reduction <add>, %43, %cst_33 [1] : vector<8x64xf32> to vector<8xf32>
    %51 = vector.shape_cast %50 : vector<8xf32> to vector<8x1xf32>
    %52 = arith.addf %49, %51 : vector<8x1xf32>
    %c0_34 = arith.constant 0 : index
    %c0_35 = arith.constant 0 : index
    %53 = vector.load %arg5[%c0_34, %c0_35] : memref<8x1xf32, #tpu.memory_space<vmem>>, vector<8x1xf32>
    tpu.vector_store %arg5[%c0_34, %c0_35], %52 {strides = array<i32>} : memref<8x1xf32, #tpu.memory_space<vmem>>, vector<8x1xf32>,
    %c0_36 = arith.constant 0 : index
    %c0_37 = arith.constant 0 : index
    %54 = vector.load %arg6[%c0_36, %c0_37] : memref<8x1xf32, #tpu.memory_space<vmem>>, vector<8x1xf32>
    %55 = arith.mulf %43, %43 : vector<8x64xf32>
    %cst_38 = arith.constant dense<0.000000e+00> : vector<8xf32>
    %56 = vector.multi_reduction <add>, %55, %cst_38 [1] : vector<8x64xf32> to vector<8xf32>
    %57 = vector.shape_cast %56 : vector<8xf32> to vector<8x1xf32>
    %58 = arith.addf %54, %57 : vector<8x1xf32>
    %c0_39 = arith.constant 0 : index
    %c0_40 = arith.constant 0 : index
    %59 = vector.load %arg6[%c0_39, %c0_40] : memref<8x1xf32, #tpu.memory_space<vmem>>, vector<8x1xf32>
    tpu.vector_store %arg6[%c0_39, %c0_40], %58 {strides = array<i32>} : memref<8x1xf32, #tpu.memory_space<vmem>>, vector<8x1xf32>,
    %c0_i32_41 = arith.constant 0 : i32
    %60 = arith.cmpi eq, %arg1, %c0_i32_41 : i32
    %61 = arith.extui %60 : i1 to i32
    %c0_i32_42 = arith.constant 0 : i32
    %62 = arith.cmpi ne, %61, %c0_i32_42 : i32
    scf.if %62 {
      %c0_43 = arith.constant 0 : index
      %c0_44 = arith.constant 0 : index
      %63 = vector.load %arg5[%c0_43, %c0_44] : memref<8x1xf32, #tpu.memory_space<vmem>>, vector<8x1xf32>
      %cst_45 = arith.constant 1.562500e-02 : f32
      %64 = vector.broadcast %cst_45 : f32 to vector<8x1xf32>
      %65 = arith.mulf %63, %64 : vector<8x1xf32>
      %c0_46 = arith.constant 0 : index
      %c0_47 = arith.constant 0 : index
      %66 = vector.load %arg6[%c0_46, %c0_47] : memref<8x1xf32, #tpu.memory_space<vmem>>, vector<8x1xf32>
      %cst_48 = arith.constant 1.562500e-02 : f32
      %67 = vector.broadcast %cst_48 : f32 to vector<8x1xf32>
      %68 = arith.mulf %66, %67 : vector<8x1xf32>
      %69 = arith.mulf %65, %65 : vector<8x1xf32>
      %70 = arith.subf %68, %69 : vector<8x1xf32>
      %cst_49 = arith.constant 0.000000e+00 : f32
      %71 = vector.broadcast %cst_49 : f32 to vector<8x1xf32>
      %72 = arith.maximumf %70, %71 : vector<8x1xf32>
      %cst_50 = arith.constant 9.99999974E-6 : f32
      %73 = vector.broadcast %cst_50 : f32 to vector<8x1xf32>
      %74 = arith.addf %72, %73 : vector<8x1xf32>
      %75 = math.rsqrt %74 : vector<8x1xf32>
      %c0_51 = arith.constant 0 : index
      %c0_52 = arith.constant 0 : index
      %c0_53 = arith.constant 0 : index
      %c0_54 = arith.constant 0 : index
      %76 = vector.load %arg4[%c0_51, %c0_52, %c0_53, %c0_54] : memref<1x8x1x64xf32, #tpu.memory_space<vmem>>, vector<1x8x1x64xf32>
      %77 = vector.shape_cast %76 : vector<1x8x1x64xf32> to vector<8x1x64xf32>
      %78 = vector.shape_cast %65 : vector<8x1xf32> to vector<8x1x1xf32>
      %79 = vector.broadcast %78 : vector<8x1x1xf32> to vector<8x1x64xf32>
      %80 = arith.subf %77, %79 : vector<8x1x64xf32>
      %81 = vector.shape_cast %75 : vector<8x1xf32> to vector<8x1x1xf32>
      %82 = vector.broadcast %81 : vector<8x1x1xf32> to vector<8x1x64xf32>
      %83 = arith.mulf %80, %82 : vector<8x1x64xf32>
      %cst_55 = arith.constant 0.000000e+00 : f32
      %84 = vector.broadcast %cst_55 : f32 to vector<8x1x64xf32>
      %85 = arith.cmpf oge, %83, %84 : vector<8x1x64xf32>
      %cst_56 = arith.constant 2.000000e-01 : f32
      %86 = vector.broadcast %cst_56 : f32 to vector<8x1x64xf32>
      %87 = arith.mulf %86, %83 : vector<8x1x64xf32>
      %88 = arith.select %85, %83, %87 : vector<8x1x64xi1>, vector<8x1x64xf32>
      %c0_57 = arith.constant 0 : index
      %c0_58 = arith.constant 0 : index
      %c0_59 = arith.constant 0 : index
      %c0_60 = arith.constant 0 : index
      %89 = vector.load %arg4[%c0_57, %c0_58, %c0_59, %c0_60] : memref<1x8x1x64xf32, #tpu.memory_space<vmem>>, vector<1x8x1x64xf32>
      %90 = vector.shape_cast %89 : vector<1x8x1x64xf32> to vector<8x1x64xf32>
      %91 = vector.shape_cast %88 : vector<8x1x64xf32> to vector<1x8x1x64xf32>
      tpu.vector_store %arg4[%c0_57, %c0_58, %c0_59, %c0_60], %91 {strides = array<i32>} : memref<1x8x1x64xf32, #tpu.memory_space<vmem>>, vector<1x8x1x64xf32>,
    } else {
    }
    return
  }
  func.func @transform_0(%arg0: i32, %arg1: i32) -> (i32, i32, i32, i32) {
    %c0_i32 = arith.constant 0 : i32
    %c0_i32_0 = arith.constant 0 : i32
    %c0_i32_1 = arith.constant 0 : i32
    %c0_i32_2 = arith.constant 0 : i32
    return %arg0, %c0_i32, %c0_i32_0, %c0_i32_1 : i32, i32, i32, i32
  }
  func.func @transform_1(%arg0: i32, %arg1: i32) -> (i32, i32, i32) {
    %c0_i32 = arith.constant 0 : i32
    %c0_i32_0 = arith.constant 0 : i32
    %c0_i32_1 = arith.constant 0 : i32
    %c0_i32_2 = arith.constant 0 : i32
    return %c0_i32, %c0_i32_0, %c0_i32_1 : i32, i32, i32
  }
  func.func @transform_2(%arg0: i32, %arg1: i32) -> (i32, i32, i32, i32) {
    %c0_i32 = arith.constant 0 : i32
    %c0_i32_0 = arith.constant 0 : i32
    %c0_i32_1 = arith.constant 0 : i32
    %c0_i32_2 = arith.constant 0 : i32
    return %arg0, %c0_i32, %c0_i32_0, %c0_i32_1 : i32, i32, i32, i32
  }
}

</mosaic_0001>

<llo_original>
// kernel: tpu_custom_call.1
$region0: #{tpu_custom_call.1}
  #allocation0 [shape = 'u32[]', space=smem, size = 0x4, offset = 0x4, fixed_abs, tag = 'smem constant byte address 0x4 - core index']
  #allocation1 [shape = 'u32[144,128]{1,0:T(1,128)}', space=vmem, size = 0x12000, scoped, tag = 'internal scratch']
  #allocation2 [shape = 'f32[8,1]{1,0:T(8,128)}', space=vmem, size = 0x1000, scoped, tag = 'scratch operand']
  #allocation3 [shape = 'f32[8,1]{1,0:T(8,128)}', space=vmem, size = 0x1000, scoped, tag = 'scratch operand']
  %s0 = inlined_call_operand.vmem [shape: f32[2,9,9,16], index: 0, kind: input, shape index: {}]
  %s1 = inlined_call_operand.vmem [shape: f32[4,16,128], index: 1, kind: input, shape index: {}]
  %s2 = inlined_call_operand.hbm [shape: f32[2,8,1,64], index: 2, kind: output, shape index: {}]
  %s3 = sld [smem:[#allocation0]]
  $region49: #{tpu_custom_call.1} parent=0
    _
  %s5 = ssub.s32 1, %s3
  %s6 = scalar_select 0, %s5, %s3
  $region1: #{tpu_custom_call.1} parent=0
    #allocation4 [shape = 'u8[8192]{0}', space=vmem, size = 0x2000, scoped, tag = 'output window, operand 0']
    #allocation5 [shape = 's32[2]{0}', space=sflag, size = 0x8, scoped, tag = 'scoped memory for tpu_custom_call.1']
    %7 = vsyncpa [#allocation5], 0
    %s8 = scalar_lea.sflag [#allocation5], 1
    %9 = vsyncpa %s8, 0
    loop: start=0, step=1, limit=4
    $region2: #{tpu_custom_call.1} parent=1 // loop_pre_header
      _
    $region3: #{tpu_custom_call.1} parent=1 // loop_header
      %s11 = sphi 0, %s15
      %p12 = scmp.ge.s32.totalorder %s11, 4
      %s18 = sphi 0, %s30
      %s19 = sphi 0, %s26
      %s20 = sphi 0, %s18
      %s21 = sphi 0, %s19
      %s22 = sphi 0, %s20
      %s23 = sphi 0, %s21
      %s33 = sphi 0, %s35
      %s36 = sphi 0, %s33
      %s37 = sphi 0, %s36
      %s53 = sphi 0, %s37
      %s57 = sphi 0, %s57
      %s59 = sphi 0, %s57
      %s60 = sphi 0, %s59
      %s74 = sphi 0, %s60
      %s80 = sphi 0, %s82
      %s83 = sphi 0, %s80
      %s84 = sphi 0, %s83
      %s100 = sphi 0, %s84
    $region4: #{tpu_custom_call.1} parent=1 // loop_header_branch
      %14 = sbr.rel (%p12) target = $region8
    $region5: #{tpu_custom_call.1} parent=1 // loop_body
      %s16 = ssub.s32 %s11, 1
      %s17 = ssub.s32 %s11, 2
      %s24 = sadd.s32 1, %s19
      %p25 = scmp.ge.s32.totalorder %s24, 1
      %s26 = scalar_select %p25, 0, %s24
      %s27 = sadd.s32 1, %s18
      %s28 = scalar_select %p25, %s27, %s18
      %p29 = scmp.ge.s32.totalorder %s28, 2
      %s30 = scalar_select %p29, 0, %s28
      %s31 = ssub.s32 %s18, %s30
      %p32 = scmp.eq.s32.totalorder %s31, 0
      %s34 = sadd.s32 %s33, 1
      %s35 = scalar_select %p32, %s33, %s34
      %p38 = pneg %p32
      %p39 = scmp.eq.s32.totalorder %s11, 1
      %p40 = por %p38, %p39
      %p41 = scmp.ne.s32.totalorder %s33, %s36
      %p42 = scmp.eq.s32.totalorder %s11, 0
      %p43 = por %p41, %p42
      %p44 = scmp.ne.s32.totalorder %s33, %s36
      %p45 = scmp.eq.s32.totalorder %s16, 1
      %p46 = por %p44, %p45
      %p47 = scmp.ne.s32.totalorder %s36, %s37
      %p48 = scmp.eq.s32.totalorder %s16, 0
      %p49 = por %p47, %p48
      %p50 = scmp.ne.s32.totalorder %s36, %s37
      %p51 = scmp.eq.s32.totalorder %s17, 1
      %p52 = por %p50, %p51
      %p54 = scmp.ne.s32.totalorder %s37, %s53
      %p55 = scmp.eq.s32.totalorder %s17, 0
      %p56 = por %p54, %p55
      %s58 = sadd.s32 %s57, 1
      %p61 = scmp.eq.s32.totalorder %s11, 1
      %p62 = scmp.ne.s32.totalorder %s57, %s59
      %p63 = scmp.eq.s32.totalorder %s11, 0
      %p64 = por %p62, %p63
      %p65 = scmp.ne.s32.totalorder %s57, %s59
      %p66 = scmp.eq.s32.totalorder %s16, 1
      %p67 = por %p65, %p66
      %p68 = scmp.ne.s32.totalorder %s59, %s60
      %p69 = scmp.eq.s32.totalorder %s16, 0
      %p70 = por %p68, %p69
      %p71 = scmp.ne.s32.totalorder %s59, %s60
      %p72 = scmp.eq.s32.totalorder %s17, 1
      %p73 = por %p71, %p72
      %p75 = scmp.ne.s32.totalorder %s60, %s74
      %p76 = scmp.eq.s32.totalorder %s17, 0
      %p77 = por %p75, %p76
      %s78 = ssub.s32 %s18, %s30
      %p79 = scmp.eq.s32.totalorder %s78, 0
      %s81 = sadd.s32 %s80, 1
      %s82 = scalar_select %p79, %s80, %s81
      %p85 = pneg %p79
      %p86 = scmp.eq.s32.totalorder %s11, 1
      %p87 = por %p85, %p86
      %p88 = scmp.ne.s32.totalorder %s80, %s83
      %p89 = scmp.eq.s32.totalorder %s11, 0
      %p90 = por %p88, %p89
      %p91 = scmp.ne.s32.totalorder %s80, %s83
      %p92 = scmp.eq.s32.totalorder %s16, 1
      %p93 = por %p91, %p92
      %p94 = scmp.ne.s32.totalorder %s83, %s84
      %p95 = scmp.eq.s32.totalorder %s16, 0
      %p96 = por %p94, %p95
      %p97 = scmp.ne.s32.totalorder %s83, %s84
      %p98 = scmp.eq.s32.totalorder %s17, 1
      %p99 = por %p97, %p98
      %p101 = scmp.ne.s32.totalorder %s84, %s100
      %p102 = scmp.eq.s32.totalorder %s17, 0
      %p103 = por %p101, %p102
      %p104 = scmp.le.s32.totalorder 1, %s11
      %p105 = scmp.lt.s32.totalorder %s11, 3
      %p106 = pnand %p104, %p105
      %p107 = pneg %p106
      // Predicated region
      $region9: #{tpu_custom_call.1} parent=5 // pred_check
        _
      $region10: #{tpu_custom_call.1} parent=5 // pred_check_branch
        %109 = sbr.rel (%p106) target = $region12
      $region11: #{tpu_custom_call.1} parent=5 // pred_region
        %s110 = ssub.s32 %s11, 1
        // Predicated region
        $region13: #{tpu_custom_call.1} parent=11 // pred_check
          %p111 = pneg %p70
        $region14: #{tpu_custom_call.1} parent=11 // pred_check_branch
          %113 = sbr.rel (%p111) target = $region16
        $region15: #{tpu_custom_call.1} parent=11 // pred_region
          _
        $region16: #{tpu_custom_call.1} parent=11 // pred_fallthru
          _
      $region12: #{tpu_custom_call.1} parent=5 // pred_fallthru
        _
      %p114 = scmp.lt.s32.totalorder %s11, 2
      // Predicated region
      $region17: #{tpu_custom_call.1} parent=5 // pred_check
        %p115 = pneg %p114
      $region18: #{tpu_custom_call.1} parent=5 // pred_check_branch
        %117 = sbr.rel (%p115) target = $region20
      $region19: #{tpu_custom_call.1} parent=5 // pred_region
        // Predicated region
        $region21: #{tpu_custom_call.1} parent=19 // pred_check
          %p118 = pneg %p43
        $region22: #{tpu_custom_call.1} parent=19 // pred_check_branch
          %120 = sbr.rel (%p118) target = $region24
        $region23: #{tpu_custom_call.1} parent=19 // pred_region
          %p121 = scmp.lt.s32.totalorder %s18, 1
          %s122 = scalar_select %p121, %s18, 1
          %s123 = smul.addr %s122, 18
          %s124 = smul.addr %s123, 8
          %s125 = scalar_lea.vmem %s0, %s124
        $region24: #{tpu_custom_call.1} parent=19 // pred_fallthru
          _
      $region20: #{tpu_custom_call.1} parent=5 // pred_fallthru
        _
      %p126 = scmp.le.s32.totalorder 1, %s11
      %p127 = scmp.lt.s32.totalorder %s11, 3
      %p128 = pnand %p126, %p127
      %p129 = pneg %p128
      // Predicated region
      $region25: #{tpu_custom_call.1} parent=5 // pred_check
        _
      $region26: #{tpu_custom_call.1} parent=5 // pred_check_branch
        %131 = sbr.rel (%p128) target = $region28
      $region27: #{tpu_custom_call.1} parent=5 // pred_region
        %s132 = ssub.s32 %s11, 1
        %p133 = scmp.lt.s32.totalorder %s20, 1
        %s134 = scalar_select %p133, %s20, 1
        %s135 = smul.addr %s134, 18
        %s136 = smul.addr %s135, 8
        %s137 = scalar_lea.vmem %s0, %s136
        %p138 = pneg %p49
        %p139 = pneg %p46
        %p140 = pneg %p70
        %p141 = pneg %p67
        %p142 = pneg %p96
        %p143 = pneg %p93
        %s144 = sand.u32 %s83, 1
        %s145 = scalar_lea.sflag [#allocation5], %s144
        %s146 = sand.u32 %s83, 1
        %s147 = smul.addr %s146, 8
        %s148 = scalar_lea.vmem [#allocation4], %s147
        %p149 = scmp.lt.s32.totalorder %s20, 1
        %s150 = scalar_select %p149, %s20, 1
        %s151 = smul.addr %s150, 18
        %s152 = smul.addr %s151, 8
        %s153 = scalar_lea.vmem %s0, %s152
        %p154 = scmp.eq.s32.totalorder %s21, 0
        // Predicated region
        $region29: #{tpu_custom_call.1} parent=27 // pred_check
          %p155 = pneg %p154
        $region30: #{tpu_custom_call.1} parent=27 // pred_check_branch
          %157 = sbr.rel (%p155) target = $region32
        $region31: #{tpu_custom_call.1} parent=27 // pred_region
          %vm158 = vcmask 7168
          %159 = vst.msk [vmem:[#allocation2] sm:$0xff] %vm158, 0.0
          %160 = vst.msk [vmem:[#allocation3] sm:$0xff] %vm158, 0.0
        $region32: #{tpu_custom_call.1} parent=27 // pred_fallthru
          _
        %s161 = smul.u32 %s21, 8
        %s162 = smul.u32 %s161, 16
        %s163 = scalar_lea.vmem %s153, %s162
        %v164 = vld [vmem:[%s163] sm:$0xff]
        %v165 = vld [vmem:[%s163 + $0x10] sm:$0xff]
        %v166 = vld [vmem:[%s163 + $0x20] sm:$0xff]
        %v167 = vld [vmem:[%s163 + $0x30] sm:$0xff]
        %v168 = vld [vmem:[%s163 + $0x40] sm:$0xff]
        %v169 = vld [vmem:[%s163 + $0x50] sm:$0xff]
        %v170 = vld [vmem:[%s163 + $0x60] sm:$0xff]
        %v171 = vld [vmem:[%s163 + $0x70] sm:$0xff]
        %v172 = vld [vmem:[%s1] sm:$0xff]
        %v173 = vld [vmem:[%s1 + $0x8] sm:$0xff]
        %v174 = vld [vmem:[%s163 + $0x1] sm:$0xff]
        %v175 = vld [vmem:[%s163 + $0x11] sm:$0xff]
        %v176 = vld [vmem:[%s163 + $0x21] sm:$0xff]
        %v177 = vld [vmem:[%s163 + $0x31] sm:$0xff]
        %v178 = vld [vmem:[%s163 + $0x41] sm:$0xff]
        %v179 = vld [vmem:[%s163 + $0x51] sm:$0xff]
        %v180 = vld [vmem:[%s163 + $0x61] sm:$0xff]
        %v181 = vld [vmem:[%s163 + $0x71] sm:$0xff]
        %s182 = scalar_lea.vmem %s1, 16
        %v183 = vld [vmem:[%s182] sm:$0xff]
        %v184 = vld [vmem:[%s182 + $0x8] sm:$0xff]
        %vm185 = vcmask 130048
        %v187 = vsel %vm185, %v174, 0
        %v190 = vsel %vm185, %v175, 0
        %v193 = vsel %vm185, %v176, 0
        %v196 = vsel %vm185, %v177, 0
        %v199 = vsel %vm185, %v178, 0
        %v202 = vsel %vm185, %v179, 0
        %v205 = vsel %vm185, %v180, 0
        %v208 = vsel %vm185, %v181, 0
        %210 = vmatprep.subr.mxu0 0.0
        %211 = vmatpush1.msra.mxu0 %v183
        %212 = vmatprep.subr.mxu0 0.0
        %213 = vmatpush1.msra.mxu0 %v184
        %214 = vmatprep.subr.mxu0 0.0
        %215 = vmatpush1.msra.mxu0 0.0
        %216 = vmatprep.subr.mxu0 0.0
        %217 = vmatpush1.msra.mxu0 0.0
        %218 = vmatprep.subr.mxu0 0.0
        %219 = vmatpush1.msra.mxu0 0.0
        %220 = vmatprep.subr.mxu0 0.0
        %221 = vmatpush1.msra.mxu0 0.0
        %222 = vmatprep.subr.mxu0 0.0
        %223 = vmatpush1.msra.mxu0 0.0
        %224 = vmatprep.subr.mxu0 0.0
        %225 = vmatpush1.msra.mxu0 0.0
        %226 = vmatprep.subr.mxu0 0.0
        %227 = vmatpush1.msra.mxu0 0.0
        %228 = vmatprep.subr.mxu0 0.0
        %229 = vmatpush1.msra.mxu0 0.0
        %230 = vmatprep.subr.mxu0 0.0
        %231 = vmatpush1.msra.mxu0 0.0
        %232 = vmatprep.subr.mxu0 0.0
        %233 = vmatpush1.msra.mxu0 0.0
        %234 = vmatprep.subr.mxu0 0.0
        %235 = vmatpush1.msra.mxu0 0.0
        %236 = vmatprep.subr.mxu0 0.0
        %237 = vmatpush1.msra.mxu0 0.0
        %238 = vmatprep.subr.mxu0 0.0
        %239 = vmatpush1.msra.mxu0 0.0
        %240 = vmatprep.subr.mxu0 0.0
        %241 = vmatpush1.msra.mxu0 0.0
        %242 = vmatprep.subr.mxu0 0.0
        %243 = vmatpush1.msra.mxu0 0.0
        %244 = vmatprep.subr.mxu0 0.0
        %245 = vmatpush1.msra.mxu0 0.0
        %246 = vmatprep.subr.mxu0 0.0
        %247 = vmatpush1.msra.mxu0 0.0
        %248 = vmatprep.subr.mxu0 0.0
        %249 = vmatpush1.msra.mxu0 0.0
        %250 = vmatprep.subr.mxu0 0.0
        %251 = vmatpush1.msra.mxu0 0.0
        %252 = vmatprep.subr.mxu0 0.0
        %253 = vmatpush1.msra.mxu0 0.0
        %254 = vmatprep.subr.mxu0 0.0
        %255 = vmatpush1.msra.mxu0 0.0
        %256 = vmatprep.subr.mxu0 0.0
        %257 = vmatpush1.msra.mxu0 0.0
        %258 = vmatprep.subr.mxu0 0.0
        %259 = vmatpush1.msra.mxu0 0.0
        %260 = vmatprep.subr.mxu0 0.0
        %261 = vmatpush1.msra.mxu0 0.0
        %262 = vmatprep.subr.mxu0 0.0
        %263 = vmatpush1.msra.mxu0 0.0
        %264 = vmatprep.subr.mxu0 0.0
        %265 = vmatpush1.msra.mxu0 0.0
        %266 = vmatprep.subr.mxu0 0.0
        %267 = vmatpush1.msra.mxu0 0.0
        %268 = vmatprep.subr.mxu0 0.0
        %269 = vmatpush1.msra.mxu0 0.0
        %270 = vmatprep.subr.mxu0 0.0
        %271 = vmatpush1.msra.mxu0 0.0
        %272 = vmatprep.subr.mxu0 0.0
        %273 = vmatpush1.msra.mxu0 0.0
        %274 = vmatprep.mubr.f32.mxu0 0.0
        %275 = vmatmul.mubr.f32.gmra.mrb[0].mxu0 %v187
        %v276 = vpop.f32.mrb[0].mxu0
        %v277 = vadd.f32 0.0, %v276
        %v278 = vpop.f32.mrb[0].mxu0
        %279 = vmatprep.mubr.f32.mxu0 0.0
        %280 = vmatmul.mubr.f32.gmra.mrb[0].mxu0 %v190
        %v281 = vpop.f32.mrb[0].mxu0
        %v282 = vadd.f32 0.0, %v281
        %v283 = vpop.f32.mrb[0].mxu0
        %284 = vmatprep.mubr.f32.mxu0 0.0
        %285 = vmatmul.mubr.f32.gmra.mrb[0].mxu0 %v193
        %v286 = vpop.f32.mrb[0].mxu0
        %v287 = vadd.f32 0.0, %v286
        %v288 = vpop.f32.mrb[0].mxu0
        %289 = vmatprep.mubr.f32.mxu0 0.0
        %290 = vmatmul.mubr.f32.gmra.mrb[0].mxu0 %v196
        %v291 = vpop.f32.mrb[0].mxu0
        %v292 = vadd.f32 0.0, %v291
        %v293 = vpop.f32.mrb[0].mxu0
        %294 = vmatprep.mubr.f32.mxu0 0.0
        %295 = vmatmul.mubr.f32.gmra.mrb[0].mxu0 %v199
        %v296 = vpop.f32.mrb[0].mxu0
        %v297 = vadd.f32 0.0, %v296
        %v298 = vpop.f32.mrb[0].mxu0
        %299 = vmatprep.mubr.f32.mxu0 0.0
        %300 = vmatmul.mubr.f32.gmra.mrb[0].mxu0 %v202
        %v301 = vpop.f32.mrb[0].mxu0
        %v302 = vadd.f32 0.0, %v301
        %v303 = vpop.f32.mrb[0].mxu0
        %304 = vmatprep.mubr.f32.mxu0 0.0
        %305 = vmatmul.mubr.f32.gmra.mrb[0].mxu0 %v205
        %v306 = vpop.f32.mrb[0].mxu0
        %v307 = vadd.f32 0.0, %v306
        %v308 = vpop.f32.mrb[0].mxu0
        %309 = vmatprep.mubr.f32.mxu0 0.0
        %310 = vmatmul.mubr.f32.gmra.mrb[0].mxu0 %v208
        %v311 = vpop.f32.mrb[0].mxu0
        %v312 = vadd.f32 0.0, %v311
        %v313 = vpop.f32.mrb[0].mxu0
        %314 = vdwg.mxu0
        %v316 = vsel %vm185, %v164, 0
        %v319 = vsel %vm185, %v165, 0
        %v322 = vsel %vm185, %v166, 0
        %v325 = vsel %vm185, %v167, 0
        %v328 = vsel %vm185, %v168, 0
        %v331 = vsel %vm185, %v169, 0
        %v334 = vsel %vm185, %v170, 0
        %v337 = vsel %vm185, %v171, 0
        %339 = vmatprep.subr.mxu0 0.0
        %340 = vmatpush1.msra.mxu0 %v172
        %341 = vmatprep.subr.mxu0 0.0
        %342 = vmatpush1.msra.mxu0 %v173
        %343 = vmatprep.subr.mxu0 0.0
        %344 = vmatpush1.msra.mxu0 0.0
        %345 = vmatprep.subr.mxu0 0.0
        %346 = vmatpush1.msra.mxu0 0.0
        %347 = vmatprep.subr.mxu0 0.0
        %348 = vmatpush1.msra.mxu0 0.0
        %349 = vmatprep.subr.mxu0 0.0
        %350 = vmatpush1.msra.mxu0 0.0
        %351 = vmatprep.subr.mxu0 0.0
        %352 = vmatpush1.msra.mxu0 0.0
        %353 = vmatprep.subr.mxu0 0.0
        %354 = vmatpush1.msra.mxu0 0.0
        %355 = vmatprep.subr.mxu0 0.0
        %356 = vmatpush1.msra.mxu0 0.0
        %357 = vmatprep.subr.mxu0 0.0
        %358 = vmatpush1.msra.mxu0 0.0
        %359 = vmatprep.subr.mxu0 0.0
        %360 = vmatpush1.msra.mxu0 0.0
        %361 = vmatprep.subr.mxu0 0.0
        %362 = vmatpush1.msra.mxu0 0.0
        %363 = vmatprep.subr.mxu0 0.0
        %364 = vmatpush1.msra.mxu0 0.0
        %365 = vmatprep.subr.mxu0 0.0
        %366 = vmatpush1.msra.mxu0 0.0
        %367 = vmatprep.subr.mxu0 0.0
        %368 = vmatpush1.msra.mxu0 0.0
        %369 = vmatprep.subr.mxu0 0.0
        %370 = vmatpush1.msra.mxu0 0.0
        %371 = vmatprep.subr.mxu0 0.0
        %372 = vmatpush1.msra.mxu0 0.0
        %373 = vmatprep.subr.mxu0 0.0
        %374 = vmatpush1.msra.mxu0 0.0
        %375 = vmatprep.subr.mxu0 0.0
        %376 = vmatpush1.msra.mxu0 0.0
        %377 = vmatprep.subr.mxu0 0.0
        %378 = vmatpush1.msra.mxu0 0.0
        %379 = vmatprep.subr.mxu0 0.0
        %380 = vmatpush1.msra.mxu0 0.0
        %381 = vmatprep.subr.mxu0 0.0
        %382 = vmatpush1.msra.mxu0 0.0
        %383 = vmatprep.subr.mxu0 0.0
        %384 = vmatpush1.msra.mxu0 0.0
        %385 = vmatprep.subr.mxu0 0.0
        %386 = vmatpush1.msra.mxu0 0.0
        %387 = vmatprep.subr.mxu0 0.0
        %388 = vmatpush1.msra.mxu0 0.0
        %389 = vmatprep.subr.mxu0 0.0
        %390 = vmatpush1.msra.mxu0 0.0
        %391 = vmatprep.subr.mxu0 0.0
        %392 = vmatpush1.msra.mxu0 0.0
        %393 = vmatprep.subr.mxu0 0.0
        %394 = vmatpush1.msra.mxu0 0.0
        %395 = vmatprep.subr.mxu0 0.0
        %396 = vmatpush1.msra.mxu0 0.0
        %397 = vmatprep.subr.mxu0 0.0
        %398 = vmatpush1.msra.mxu0 0.0
        %399 = vmatprep.subr.mxu0 0.0
        %400 = vmatpush1.msra.mxu0 0.0
        %401 = vmatprep.subr.mxu0 0.0
        %402 = vmatpush1.msra.mxu0 0.0
        %403 = vmatprep.mubr.f32.mxu0 0.0
        %404 = vmatmul.mubr.f32.gmra.mrb[0].mxu0 %v316
        %v405 = vpop.f32.mrb[0].mxu0
        %v406 = vadd.f32 %v277, %v405
        %v407 = vpop.f32.mrb[0].mxu0
        %408 = vmatprep.mubr.f32.mxu0 0.0
        %409 = vmatmul.mubr.f32.gmra.mrb[0].mxu0 %v319
        %v410 = vpop.f32.mrb[0].mxu0
        %v411 = vadd.f32 %v282, %v410
        %v412 = vpop.f32.mrb[0].mxu0
        %413 = vmatprep.mubr.f32.mxu0 0.0
        %414 = vmatmul.mubr.f32.gmra.mrb[0].mxu0 %v322
        %v415 = vpop.f32.mrb[0].mxu0
        %v416 = vadd.f32 %v287, %v415
        %v417 = vpop.f32.mrb[0].mxu0
        %418 = vmatprep.mubr.f32.mxu0 0.0
        %419 = vmatmul.mubr.f32.gmra.mrb[0].mxu0 %v325
        %v420 = vpop.f32.mrb[0].mxu0
        %v421 = vadd.f32 %v292, %v420
        %v422 = vpop.f32.mrb[0].mxu0
        %423 = vmatprep.mubr.f32.mxu0 0.0
        %424 = vmatmul.mubr.f32.gmra.mrb[0].mxu0 %v328
        %v425 = vpop.f32.mrb[0].mxu0
        %v426 = vadd.f32 %v297, %v425
        %v427 = vpop.f32.mrb[0].mxu0
        %428 = vmatprep.mubr.f32.mxu0 0.0
        %429 = vmatmul.mubr.f32.gmra.mrb[0].mxu0 %v331
        %v430 = vpop.f32.mrb[0].mxu0
        %v431 = vadd.f32 %v302, %v430
        %v432 = vpop.f32.mrb[0].mxu0
        %433 = vmatprep.mubr.f32.mxu0 0.0
        %434 = vmatmul.mubr.f32.gmra.mrb[0].mxu0 %v334
        %v435 = vpop.f32.mrb[0].mxu0
        %v436 = vadd.f32 %v307, %v435
        %v437 = vpop.f32.mrb[0].mxu0
        %438 = vmatprep.mubr.f32.mxu0 0.0
        %439 = vmatmul.mubr.f32.gmra.mrb[0].mxu0 %v337
        %v440 = vpop.f32.mrb[0].mxu0
        %v441 = vadd.f32 %v312, %v440
        %v442 = vpop.f32.mrb[0].mxu0
        %443 = vdwg.mxu0
        %s444 = sadd.s32 %s161, 1
        %s445 = smul.u32 %s444, 16
        %s446 = scalar_lea.vmem %s153, %s445
        %v447 = vld [vmem:[%s446] sm:$0xff]
        %v448 = vld [vmem:[%s446 + $0x10] sm:$0xff]
        %v449 = vld [vmem:[%s446 + $0x20] sm:$0xff]
        %v450 = vld [vmem:[%s446 + $0x30] sm:$0xff]
        %v451 = vld [vmem:[%s446 + $0x40] sm:$0xff]
        %v452 = vld [vmem:[%s446 + $0x50] sm:$0xff]
        %v453 = vld [vmem:[%s446 + $0x60] sm:$0xff]
        %v454 = vld [vmem:[%s446 + $0x70] sm:$0xff]
        %s455 = scalar_lea.vmem %s1, 32
        %v456 = vld [vmem:[%s455] sm:$0xff]
        %v457 = vld [vmem:[%s455 + $0x8] sm:$0xff]
        %v459 = vsel %vm185, %v447, 0
        %v462 = vsel %vm185, %v448, 0
        %v465 = vsel %vm185, %v449, 0
        %v468 = vsel %vm185, %v450, 0
        %v471 = vsel %vm185, %v451, 0
        %v474 = vsel %vm185, %v452, 0
        %v477 = vsel %vm185, %v453, 0
        %v480 = vsel %vm185, %v454, 0
        %482 = vmatprep.subr.mxu0 0.0
        %483 = vmatpush1.msra.mxu0 %v456
        %484 = vmatprep.subr.mxu0 0.0
        %485 = vmatpush1.msra.mxu0 %v457
        %486 = vmatprep.subr.mxu0 0.0
        %487 = vmatpush1.msra.mxu0 0.0
        %488 = vmatprep.subr.mxu0 0.0
        %489 = vmatpush1.msra.mxu0 0.0
        %490 = vmatprep.subr.mxu0 0.0
        %491 = vmatpush1.msra.mxu0 0.0
        %492 = vmatprep.subr.mxu0 0.0
        %493 = vmatpush1.msra.mxu0 0.0
        %494 = vmatprep.subr.mxu0 0.0
        %495 = vmatpush1.msra.mxu0 0.0
        %496 = vmatprep.subr.mxu0 0.0
        %497 = vmatpush1.msra.mxu0 0.0
        %498 = vmatprep.subr.mxu0 0.0
        %499 = vmatpush1.msra.mxu0 0.0
        %500 = vmatprep.subr.mxu0 0.0
        %501 = vmatpush1.msra.mxu0 0.0
        %502 = vmatprep.subr.mxu0 0.0
        %503 = vmatpush1.msra.mxu0 0.0
        %504 = vmatprep.subr.mxu0 0.0
        %505 = vmatpush1.msra.mxu0 0.0
        %506 = vmatprep.subr.mxu0 0.0
        %507 = vmatpush1.msra.mxu0 0.0
        %508 = vmatprep.subr.mxu0 0.0
        %509 = vmatpush1.msra.mxu0 0.0
        %510 = vmatprep.subr.mxu0 0.0
        %511 = vmatpush1.msra.mxu0 0.0
        %512 = vmatprep.subr.mxu0 0.0
        %513 = vmatpush1.msra.mxu0 0.0
        %514 = vmatprep.subr.mxu0 0.0
        %515 = vmatpush1.msra.mxu0 0.0
        %516 = vmatprep.subr.mxu0 0.0
        %517 = vmatpush1.msra.mxu0 0.0
        %518 = vmatprep.subr.mxu0 0.0
        %519 = vmatpush1.msra.mxu0 0.0
        %520 = vmatprep.subr.mxu0 0.0
        %521 = vmatpush1.msra.mxu0 0.0
        %522 = vmatprep.subr.mxu0 0.0
        %523 = vmatpush1.msra.mxu0 0.0
        %524 = vmatprep.subr.mxu0 0.0
        %525 = vmatpush1.msra.mxu0 0.0
        %526 = vmatprep.subr.mxu0 0.0
        %527 = vmatpush1.msra.mxu0 0.0
        %528 = vmatprep.subr.mxu0 0.0
        %529 = vmatpush1.msra.mxu0 0.0
        %530 = vmatprep.subr.mxu0 0.0
        %531 = vmatpush1.msra.mxu0 0.0
        %532 = vmatprep.subr.mxu0 0.0
        %533 = vmatpush1.msra.mxu0 0.0
        %534 = vmatprep.subr.mxu0 0.0
        %535 = vmatpush1.msra.mxu0 0.0
        %536 = vmatprep.subr.mxu0 0.0
        %537 = vmatpush1.msra.mxu0 0.0
        %538 = vmatprep.subr.mxu0 0.0
        %539 = vmatpush1.msra.mxu0 0.0
        %540 = vmatprep.subr.mxu0 0.0
        %541 = vmatpush1.msra.mxu0 0.0
        %542 = vmatprep.subr.mxu0 0.0
        %543 = vmatpush1.msra.mxu0 0.0
        %544 = vmatprep.subr.mxu0 0.0
        %545 = vmatpush1.msra.mxu0 0.0
        %546 = vmatprep.mubr.f32.mxu0 0.0
        %547 = vmatmul.mubr.f32.gmra.mrb[0].mxu0 %v459
        %v548 = vpop.f32.mrb[0].mxu0
        %v549 = vadd.f32 0.0, %v548
        %v550 = vpop.f32.mrb[0].mxu0
        %551 = vmatprep.mubr.f32.mxu0 0.0
        %552 = vmatmul.mubr.f32.gmra.mrb[0].mxu0 %v462
        %v553 = vpop.f32.mrb[0].mxu0
        %v554 = vadd.f32 0.0, %v553
        %v555 = vpop.f32.mrb[0].mxu0
        %556 = vmatprep.mubr.f32.mxu0 0.0
        %557 = vmatmul.mubr.f32.gmra.mrb[0].mxu0 %v465
        %v558 = vpop.f32.mrb[0].mxu0
        %v559 = vadd.f32 0.0, %v558
        %v560 = vpop.f32.mrb[0].mxu0
        %561 = vmatprep.mubr.f32.mxu0 0.0
        %562 = vmatmul.mubr.f32.gmra.mrb[0].mxu0 %v468
        %v563 = vpop.f32.mrb[0].mxu0
        %v564 = vadd.f32 0.0, %v563
        %v565 = vpop.f32.mrb[0].mxu0
        %566 = vmatprep.mubr.f32.mxu0 0.0
        %567 = vmatmul.mubr.f32.gmra.mrb[0].mxu0 %v471
        %v568 = vpop.f32.mrb[0].mxu0
        %v569 = vadd.f32 0.0, %v568
        %v570 = vpop.f32.mrb[0].mxu0
        %571 = vmatprep.mubr.f32.mxu0 0.0
        %572 = vmatmul.mubr.f32.gmra.mrb[0].mxu0 %v474
        %v573 = vpop.f32.mrb[0].mxu0
        %v574 = vadd.f32 0.0, %v573
        %v575 = vpop.f32.mrb[0].mxu0
        %576 = vmatprep.mubr.f32.mxu0 0.0
        %577 = vmatmul.mubr.f32.gmra.mrb[0].mxu0 %v477
        %v578 = vpop.f32.mrb[0].mxu0
        %v579 = vadd.f32 0.0, %v578
        %v580 = vpop.f32.mrb[0].mxu0
        %581 = vmatprep.mubr.f32.mxu0 0.0
        %582 = vmatmul.mubr.f32.gmra.mrb[0].mxu0 %v480
        %v583 = vpop.f32.mrb[0].mxu0
        %v584 = vadd.f32 0.0, %v583
        %v585 = vpop.f32.mrb[0].mxu0
        %586 = vdwg.mxu0
        %v587 = vadd.f32 %v406, %v549
        %v588 = vadd.f32 %v411, %v554
        %v589 = vadd.f32 %v416, %v559
        %v590 = vadd.f32 %v421, %v564
        %v591 = vadd.f32 %v426, %v569
        %v592 = vadd.f32 %v431, %v574
        %v593 = vadd.f32 %v436, %v579
        %v594 = vadd.f32 %v441, %v584
        %v595 = vld [vmem:[%s446 + $0x1] sm:$0xff]
        %v596 = vld [vmem:[%s446 + $0x11] sm:$0xff]
        %v597 = vld [vmem:[%s446 + $0x21] sm:$0xff]
        %v598 = vld [vmem:[%s446 + $0x31] sm:$0xff]
        %v599 = vld [vmem:[%s446 + $0x41] sm:$0xff]
        %v600 = vld [vmem:[%s446 + $0x51] sm:$0xff]
        %v601 = vld [vmem:[%s446 + $0x61] sm:$0xff]
        %v602 = vld [vmem:[%s446 + $0x71] sm:$0xff]
        %s603 = scalar_lea.vmem %s1, 48
        %v604 = vld [vmem:[%s603] sm:$0xff]
        %v605 = vld [vmem:[%s603 + $0x8] sm:$0xff]
        %v607 = vsel %vm185, %v595, 0
        %v610 = vsel %vm185, %v596, 0
        %v613 = vsel %vm185, %v597, 0
        %v616 = vsel %vm185, %v598, 0
        %v619 = vsel %vm185, %v599, 0
        %v622 = vsel %vm185, %v600, 0
        %v625 = vsel %vm185, %v601, 0
        %v628 = vsel %vm185, %v602, 0
        %630 = vmatprep.subr.mxu0 0.0
        %631 = vmatpush1.msra.mxu0 %v604
        %632 = vmatprep.subr.mxu0 0.0
        %633 = vmatpush1.msra.mxu0 %v605
        %634 = vmatprep.subr.mxu0 0.0
        %635 = vmatpush1.msra.mxu0 0.0
        %636 = vmatprep.subr.mxu0 0.0
        %637 = vmatpush1.msra.mxu0 0.0
        %638 = vmatprep.subr.mxu0 0.0
        %639 = vmatpush1.msra.mxu0 0.0
        %640 = vmatprep.subr.mxu0 0.0
        %641 = vmatpush1.msra.mxu0 0.0
        %642 = vmatprep.subr.mxu0 0.0
        %643 = vmatpush1.msra.mxu0 0.0
        %644 = vmatprep.subr.mxu0 0.0
        %645 = vmatpush1.msra.mxu0 0.0
        %646 = vmatprep.subr.mxu0 0.0
        %647 = vmatpush1.msra.mxu0 0.0
        %648 = vmatprep.subr.mxu0 0.0
        %649 = vmatpush1.msra.mxu0 0.0
        %650 = vmatprep.subr.mxu0 0.0
        %651 = vmatpush1.msra.mxu0 0.0
        %652 = vmatprep.subr.mxu0 0.0
        %653 = vmatpush1.msra.mxu0 0.0
        %654 = vmatprep.subr.mxu0 0.0
        %655 = vmatpush1.msra.mxu0 0.0
        %656 = vmatprep.subr.mxu0 0.0
        %657 = vmatpush1.msra.mxu0 0.0
        %658 = vmatprep.subr.mxu0 0.0
        %659 = vmatpush1.msra.mxu0 0.0
        %660 = vmatprep.subr.mxu0 0.0
        %661 = vmatpush1.msra.mxu0 0.0
        %662 = vmatprep.subr.mxu0 0.0
        %663 = vmatpush1.msra.mxu0 0.0
        %664 = vmatprep.subr.mxu0 0.0
        %665 = vmatpush1.msra.mxu0 0.0
        %666 = vmatprep.subr.mxu0 0.0
        %667 = vmatpush1.msra.mxu0 0.0
        %668 = vmatprep.subr.mxu0 0.0
        %669 = vmatpush1.msra.mxu0 0.0
        %670 = vmatprep.subr.mxu0 0.0
        %671 = vmatpush1.msra.mxu0 0.0
        %672 = vmatprep.subr.mxu0 0.0
        %673 = vmatpush1.msra.mxu0 0.0
        %674 = vmatprep.subr.mxu0 0.0
        %675 = vmatpush1.msra.mxu0 0.0
        %676 = vmatprep.subr.mxu0 0.0
        %677 = vmatpush1.msra.mxu0 0.0
        %678 = vmatprep.subr.mxu0 0.0
        %679 = vmatpush1.msra.mxu0 0.0
        %680 = vmatprep.subr.mxu0 0.0
        %681 = vmatpush1.msra.mxu0 0.0
        %682 = vmatprep.subr.mxu0 0.0
        %683 = vmatpush1.msra.mxu0 0.0
        %684 = vmatprep.subr.mxu0 0.0
        %685 = vmatpush1.msra.mxu0 0.0
        %686 = vmatprep.subr.mxu0 0.0
        %687 = vmatpush1.msra.mxu0 0.0
        %688 = vmatprep.subr.mxu0 0.0
        %689 = vmatpush1.msra.mxu0 0.0
        %690 = vmatprep.subr.mxu0 0.0
        %691 = vmatpush1.msra.mxu0 0.0
        %692 = vmatprep.subr.mxu0 0.0
        %693 = vmatpush1.msra.mxu0 0.0
        %694 = vmatprep.mubr.f32.mxu0 0.0
        %695 = vmatmul.mubr.f32.gmra.mrb[0].mxu0 %v607
        %v696 = vpop.f32.mrb[0].mxu0
        %v697 = vadd.f32 0.0, %v696
        %v698 = vpop.f32.mrb[0].mxu0
        %699 = vmatprep.mubr.f32.mxu0 0.0
        %700 = vmatmul.mubr.f32.gmra.mrb[0].mxu0 %v610
        %v701 = vpop.f32.mrb[0].mxu0
        %v702 = vadd.f32 0.0, %v701
        %v703 = vpop.f32.mrb[0].mxu0
        %704 = vmatprep.mubr.f32.mxu0 0.0
        %705 = vmatmul.mubr.f32.gmra.mrb[0].mxu0 %v613
        %v706 = vpop.f32.mrb[0].mxu0
        %v707 = vadd.f32 0.0, %v706
        %v708 = vpop.f32.mrb[0].mxu0
        %709 = vmatprep.mubr.f32.mxu0 0.0
        %710 = vmatmul.mubr.f32.gmra.mrb[0].mxu0 %v616
        %v711 = vpop.f32.mrb[0].mxu0
        %v712 = vadd.f32 0.0, %v711
        %v713 = vpop.f32.mrb[0].mxu0
        %714 = vmatprep.mubr.f32.mxu0 0.0
        %715 = vmatmul.mubr.f32.gmra.mrb[0].mxu0 %v619
        %v716 = vpop.f32.mrb[0].mxu0
        %v717 = vadd.f32 0.0, %v716
        %v718 = vpop.f32.mrb[0].mxu0
        %719 = vmatprep.mubr.f32.mxu0 0.0
        %720 = vmatmul.mubr.f32.gmra.mrb[0].mxu0 %v622
        %v721 = vpop.f32.mrb[0].mxu0
        %v722 = vadd.f32 0.0, %v721
        %v723 = vpop.f32.mrb[0].mxu0
        %724 = vmatprep.mubr.f32.mxu0 0.0
        %725 = vmatmul.mubr.f32.gmra.mrb[0].mxu0 %v625
        %v726 = vpop.f32.mrb[0].mxu0
        %v727 = vadd.f32 0.0, %v726
        %v728 = vpop.f32.mrb[0].mxu0
        %729 = vmatprep.mubr.f32.mxu0 0.0
        %730 = vmatmul.mubr.f32.gmra.mrb[0].mxu0 %v628
        %v731 = vpop.f32.mrb[0].mxu0
        %v732 = vadd.f32 0.0, %v731
        %v733 = vpop.f32.mrb[0].mxu0
        %734 = vdwg.mxu0
        %v735 = vadd.f32 %v587, %v697
        %v736 = vadd.f32 %v588, %v702
        %v737 = vadd.f32 %v589, %v707
        %v738 = vadd.f32 %v590, %v712
        %v739 = vadd.f32 %v591, %v717
        %v740 = vadd.f32 %v592, %v722
        %v741 = vadd.f32 %v593, %v727
        %v742 = vadd.f32 %v594, %v732
        %743 = vxpose.xlu0.b32.start [1/16] %v735, 128
        %744 = vxpose.xlu0.b32.cont [2/16] %v736, 128
        %745 = vxpose.xlu0.b32.cont [3/16] %v737, 128
        %746 = vxpose.xlu0.b32.cont [4/16] %v738, 128
        %747 = vxpose.xlu0.b32.cont [5/16] %v739, 128
        %748 = vxpose.xlu0.b32.cont [6/16] %v740, 128
        %749 = vxpose.xlu0.b32.cont [7/16] %v741, 128
        %750 = vxpose.xlu0.b32.cont [8/16] %v742, 128
        %751 = vxpose.xlu0.b32.cont [9/16] 0.0, 128
        %752 = vxpose.xlu0.b32.cont [10/16] 0.0, 128
        %753 = vxpose.xlu0.b32.cont [11/16] 0.0, 128
        %754 = vxpose.xlu0.b32.cont [12/16] 0.0, 128
        %755 = vxpose.xlu0.b32.cont [13/16] 0.0, 128
        %756 = vxpose.xlu0.b32.cont [14/16] 0.0, 128
        %757 = vxpose.xlu0.b32.cont [15/16] 0.0, 128
        %758 = vxpose.xlu0.b32.end [16/16] 0.0, 128
        %v759 = vpop.trf.xlu0
        %v760 = vpop.trf.xlu0
        %v761 = vpop.trf.xlu0
        %v762 = vpop.trf.xlu0
        %v763 = vpop.trf.xlu0
        %v764 = vpop.trf.xlu0
        %v765 = vpop.trf.xlu0
        %v766 = vpop.trf.xlu0
        %v767 = vpop.trf.xlu0
        %v768 = vpop.trf.xlu0
        %v769 = vpop.trf.xlu0
        %v770 = vpop.trf.xlu0
        %v771 = vpop.trf.xlu0
        %v772 = vpop.trf.xlu0
        %v773 = vpop.trf.xlu0
        %v774 = vpop.trf.xlu0
        %v776 = vcombine.high %v759, %v759
        %v778 = vunpack.c.l.s4 1966171168
        %v779 = vunpack.c.0.s8 %v778
        %v780 = vlaneseq
        %v781 = vshrl.u32 %v780, 7
        %v782 = vsub.s32 %v779, %v781
        %v783 = vrot.slane %v759, %v782
        %v785 = vunpack.c.l.s4 1966171168
        %v786 = vunpack.c.0.s8 %v785
        %v787 = vlaneseq
        %v788 = vshrl.u32 %v787, 7
        %v789 = vsub.s32 %v786, %v788
        %v790 = vrot.slane %v776, %v789
        %v791 = vcombine.high %v783, %v783
        %v792 = vcombine.high %v790, %v790
        %v794 = vunpack.c.l.s4 1966171168
        %v795 = vunpack.c.0.s8 %v794
        %v796 = vlaneseq
        %v797 = vshrl.u32 %v796, 7
        %v798 = vsub.s32 %v795, %v797
        %v799 = vrot.slane %v783, %v798
        %v801 = vunpack.c.l.s4 1966171168
        %v802 = vunpack.c.0.s8 %v801
        %v803 = vlaneseq
        %v804 = vshrl.u32 %v803, 7
        %v805 = vsub.s32 %v802, %v804
        %v806 = vrot.slane %v790, %v805
        %v808 = vunpack.c.l.s4 1966171168
        %v809 = vunpack.c.0.s8 %v808
        %v810 = vlaneseq
        %v811 = vshrl.u32 %v810, 7
        %v812 = vsub.s32 %v809, %v811
        %v813 = vrot.slane %v791, %v812
        %v815 = vunpack.c.l.s4 1966171168
        %v816 = vunpack.c.0.s8 %v815
        %v817 = vlaneseq
        %v818 = vshrl.u32 %v817, 7
        %v819 = vsub.s32 %v816, %v818
        %v820 = vrot.slane %v792, %v819
        %v821 = vcombine.high %v799, %v799
        %v822 = vcombine.high %v806, %v806
        %v823 = vcombine.high %v813, %v813
        %v824 = vcombine.high %v820, %v820
        %s833 = scalar_lea.vmem %s148, %s21 [#allocation4]
        %vm834 = vcmask 516096
        %835 = vst.msk [vmem:[%s833] sm:$0x1] %vm834, %v799
        %836 = vst.msk [vmem:[%s833 + $0x1] sm:$0x1] %vm834, %v813
        %837 = vst.msk [vmem:[%s833 + $0x2] sm:$0x1] %vm834, %v821
        %838 = vst.msk [vmem:[%s833 + $0x3] sm:$0x1] %vm834, %v823
        %839 = vst.msk [vmem:[%s833 + $0x4] sm:$0x1] %vm834, %v806
        %840 = vst.msk [vmem:[%s833 + $0x5] sm:$0x1] %vm834, %v820
        %841 = vst.msk [vmem:[%s833 + $0x6] sm:$0x1] %vm834, %v822
        %842 = vst.msk [vmem:[%s833 + $0x7] sm:$0x1] %vm834, %v824
        %v843 = vld [vmem:[#allocation2] sm:$0xff]
        %vm844 = vcmask 523264
        %v845 = vsel %vm844, %v759, 0.0
        %846 = vadd.xlane.f32.xlu0 %v845
        %v847 = vpop.xlane.xlu0 %846
        %v848 = vadd.f32 %v843, %v847
        %vm849 = vcmask 7168
        %850 = vst.msk [vmem:[#allocation2] sm:$0xff] %vm849, %v848
        %v851 = vld [vmem:[#allocation3] sm:$0xff]
        %v852 = vmul.f32 %v759, %v759
        %v853 = vsel %vm844, %v852, 0.0
        %854 = vadd.xlane.f32.xlu0 %v853
        %v855 = vpop.xlane.xlu0 %854
        %v856 = vadd.f32 %v851, %v855
        %857 = vst.msk [vmem:[#allocation3] sm:$0xff] %vm849, %v856
        // Predicated region
        $region33: #{tpu_custom_call.1} parent=27 // pred_check
          %p858 = pneg %p154
        $region34: #{tpu_custom_call.1} parent=27 // pred_check_branch
          %860 = sbr.rel (%p858) target = $region36
        $region35: #{tpu_custom_call.1} parent=27 // pred_region
          %v861 = vld [vmem:[#allocation2] sm:$0xff]
          %v862 = vmul.f32 %v861, 0.015625
          %v863 = vld [vmem:[#allocation3] sm:$0xff]
          %v864 = vmul.f32 %v863, 0.015625
          %v865 = vmul.f32 %v862, %v862
          %v866 = vsub.f32 %v864, %v865
          %v867 = vmax.f32 %v866, 0.0
          %v868 = vadd.f32 %v867, 1e-05
          %v869 = vrsqrt.pop %v868
          %v870 = vld [vmem:[%s148] sm:$0x1]
          %v871 = vld [vmem:[%s148 + $0x1] sm:$0x1]
          %v872 = vld [vmem:[%s148 + $0x2] sm:$0x1]
          %v873 = vld [vmem:[%s148 + $0x3] sm:$0x1]
          %v874 = vld [vmem:[%s148 + $0x4] sm:$0x1]
          %v875 = vld [vmem:[%s148 + $0x5] sm:$0x1]
          %v876 = vld [vmem:[%s148 + $0x6] sm:$0x1]
          %v877 = vld [vmem:[%s148 + $0x7] sm:$0x1]
          %v879 = vcombine.high %v862, %v862
          %v881 = vunpack.c.l.s4 1966171168
          %v882 = vunpack.c.0.s8 %v881
          %v883 = vlaneseq
          %v884 = vshrl.u32 %v883, 7
          %v885 = vsub.s32 %v882, %v884
          %v886 = vrot.slane %v862, %v885
          %v888 = vunpack.c.l.s4 1966171168
          %v889 = vunpack.c.0.s8 %v888
          %v890 = vlaneseq
          %v891 = vshrl.u32 %v890, 7
          %v892 = vsub.s32 %v889, %v891
          %v893 = vrot.slane %v879, %v892
          %v894 = vcombine.high %v886, %v886
          %v895 = vcombine.high %v893, %v893
          %v897 = vunpack.c.l.s4 1966171168
          %v898 = vunpack.c.0.s8 %v897
          %v899 = vlaneseq
          %v900 = vshrl.u32 %v899, 7
          %v901 = vsub.s32 %v898, %v900
          %v902 = vrot.slane %v886, %v901
          %v904 = vunpack.c.l.s4 1966171168
          %v905 = vunpack.c.0.s8 %v904
          %v906 = vlaneseq
          %v907 = vshrl.u32 %v906, 7
          %v908 = vsub.s32 %v905, %v907
          %v909 = vrot.slane %v893, %v908
          %v911 = vunpack.c.l.s4 1966171168
          %v912 = vunpack.c.0.s8 %v911
          %v913 = vlaneseq
          %v914 = vshrl.u32 %v913, 7
          %v915 = vsub.s32 %v912, %v914
          %v916 = vrot.slane %v894, %v915
          %v918 = vunpack.c.l.s4 1966171168
          %v919 = vunpack.c.0.s8 %v918
          %v920 = vlaneseq
          %v921 = vshrl.u32 %v920, 7
          %v922 = vsub.s32 %v919, %v921
          %v923 = vrot.slane %v895, %v922
          %v924 = vcombine.high %v902, %v902
          %v925 = vcombine.high %v909, %v909
          %v926 = vcombine.high %v916, %v916
          %v927 = vcombine.high %v923, %v923
          %928 = vset.pattern.permute.xlu0 0
          %929 = vperm.xlu0 %928, %v902
          %v930 = vpop.permute.xlu0 %929
          %v932 = vlaneseq
          %v933 = vshrl.u32 %v932, 7
          %v934 = vsub.s32 0, %v933
          %v935 = vrot.slane %v930, %v934
          %936 = vset.pattern.permute.xlu0 0
          %937 = vperm.xlu0 %936, %v916
          %v938 = vpop.permute.xlu0 %937
          %v940 = vlaneseq
          %v941 = vshrl.u32 %v940, 7
          %v942 = vsub.s32 0, %v941
          %v943 = vrot.slane %v938, %v942
          %944 = vset.pattern.permute.xlu0 0
          %945 = vperm.xlu0 %944, %v924
          %v946 = vpop.permute.xlu0 %945
          %v948 = vlaneseq
          %v949 = vshrl.u32 %v948, 7
          %v950 = vsub.s32 0, %v949
          %v951 = vrot.slane %v946, %v950
          %952 = vset.pattern.permute.xlu0 0
          %953 = vperm.xlu0 %952, %v926
          %v954 = vpop.permute.xlu0 %953
          %v956 = vlaneseq
          %v957 = vshrl.u32 %v956, 7
          %v958 = vsub.s32 0, %v957
          %v959 = vrot.slane %v954, %v958
          %960 = vset.pattern.permute.xlu0 0
          %961 = vperm.xlu0 %960, %v909
          %v962 = vpop.permute.xlu0 %961
          %v964 = vlaneseq
          %v965 = vshrl.u32 %v964, 7
          %v966 = vsub.s32 0, %v965
          %v967 = vrot.slane %v962, %v966
          %968 = vset.pattern.permute.xlu0 0
          %969 = vperm.xlu0 %968, %v923
          %v970 = vpop.permute.xlu0 %969
          %v972 = vlaneseq
          %v973 = vshrl.u32 %v972, 7
          %v974 = vsub.s32 0, %v973
          %v975 = vrot.slane %v970, %v974
          %976 = vset.pattern.permute.xlu0 0
          %977 = vperm.xlu0 %976, %v925
          %v978 = vpop.permute.xlu0 %977
          %v980 = vlaneseq
          %v981 = vshrl.u32 %v980, 7
          %v982 = vsub.s32 0, %v981
          %v983 = vrot.slane %v978, %v982
          %984 = vset.pattern.permute.xlu0 0
          %985 = vperm.xlu0 %984, %v927
          %v986 = vpop.permute.xlu0 %985
          %v988 = vlaneseq
          %v989 = vshrl.u32 %v988, 7
          %v990 = vsub.s32 0, %v989
          %v991 = vrot.slane %v986, %v990
          %v992 = vsub.f32 %v870, %v935
          %v993 = vsub.f32 %v871, %v943
          %v994 = vsub.f32 %v872, %v951
          %v995 = vsub.f32 %v873, %v959
          %v996 = vsub.f32 %v874, %v967
          %v997 = vsub.f32 %v875, %v975
          %v998 = vsub.f32 %v876, %v983
          %v999 = vsub.f32 %v877, %v991
          %v1001 = vcombine.high %v869, %v869
          %v1003 = vunpack.c.l.s4 1966171168
          %v1004 = vunpack.c.0.s8 %v1003
          %v1005 = vlaneseq
          %v1006 = vshrl.u32 %v1005, 7
          %v1007 = vsub.s32 %v1004, %v1006
          %v1008 = vrot.slane %v869, %v1007
          %v1010 = vunpack.c.l.s4 1966171168
          %v1011 = vunpack.c.0.s8 %v1010
          %v1012 = vlaneseq
          %v1013 = vshrl.u32 %v1012, 7
          %v1014 = vsub.s32 %v1011, %v1013
          %v1015 = vrot.slane %v1001, %v1014
          %v1016 = vcombine.high %v1008, %v1008
          %v1017 = vcombine.high %v1015, %v1015
          %v1019 = vunpack.c.l.s4 1966171168
          %v1020 = vunpack.c.0.s8 %v1019
          %v1021 = vlaneseq
          %v1022 = vshrl.u32 %v1021, 7
          %v1023 = vsub.s32 %v1020, %v1022
          %v1024 = vrot.slane %v1008, %v1023
          %v1026 = vunpack.c.l.s4 1966171168
          %v1027 = vunpack.c.0.s8 %v1026
          %v1028 = vlaneseq
          %v1029 = vshrl.u32 %v1028, 7
          %v1030 = vsub.s32 %v1027, %v1029
          %v1031 = vrot.slane %v1015, %v1030
          %v1033 = vunpack.c.l.s4 1966171168
          %v1034 = vunpack.c.0.s8 %v1033
          %v1035 = vlaneseq
          %v1036 = vshrl.u32 %v1035, 7
          %v1037 = vsub.s32 %v1034, %v1036
          %v1038 = vrot.slane %v1016, %v1037
          %v1040 = vunpack.c.l.s4 1966171168
          %v1041 = vunpack.c.0.s8 %v1040
          %v1042 = vlaneseq
          %v1043 = vshrl.u32 %v1042, 7
          %v1044 = vsub.s32 %v1041, %v1043
          %v1045 = vrot.slane %v1017, %v1044
          %v1046 = vcombine.high %v1024, %v1024
          %v1047 = vcombine.high %v1031, %v1031
          %v1048 = vcombine.high %v1038, %v1038
          %v1049 = vcombine.high %v1045, %v1045
          %1050 = vset.pattern.permute.xlu0 0
          %1051 = vperm.xlu0 %1050, %v1024
          %v1052 = vpop.permute.xlu0 %1051
          %v1054 = vlaneseq
          %v1055 = vshrl.u32 %v1054, 7
          %v1056 = vsub.s32 0, %v1055
          %v1057 = vrot.slane %v1052, %v1056
          %1058 = vset.pattern.permute.xlu0 0
          %1059 = vperm.xlu0 %1058, %v1038
          %v1060 = vpop.permute.xlu0 %1059
          %v1062 = vlaneseq
          %v1063 = vshrl.u32 %v1062, 7
          %v1064 = vsub.s32 0, %v1063
          %v1065 = vrot.slane %v1060, %v1064
          %1066 = vset.pattern.permute.xlu0 0
          %1067 = vperm.xlu0 %1066, %v1046
          %v1068 = vpop.permute.xlu0 %1067
          %v1070 = vlaneseq
          %v1071 = vshrl.u32 %v1070, 7
          %v1072 = vsub.s32 0, %v1071
          %v1073 = vrot.slane %v1068, %v1072
          %1074 = vset.pattern.permute.xlu0 0
          %1075 = vperm.xlu0 %1074, %v1048
          %v1076 = vpop.permute.xlu0 %1075
          %v1078 = vlaneseq
          %v1079 = vshrl.u32 %v1078, 7
          %v1080 = vsub.s32 0, %v1079
          %v1081 = vrot.slane %v1076, %v1080
          %1082 = vset.pattern.permute.xlu0 0
          %1083 = vperm.xlu0 %1082, %v1031
          %v1084 = vpop.permute.xlu0 %1083
          %v1086 = vlaneseq
          %v1087 = vshrl.u32 %v1086, 7
          %v1088 = vsub.s32 0, %v1087
          %v1089 = vrot.slane %v1084, %v1088
          %1090 = vset.pattern.permute.xlu0 0
          %1091 = vperm.xlu0 %1090, %v1045
          %v1092 = vpop.permute.xlu0 %1091
          %v1094 = vlaneseq
          %v1095 = vshrl.u32 %v1094, 7
          %v1096 = vsub.s32 0, %v1095
          %v1097 = vrot.slane %v1092, %v1096
          %1098 = vset.pattern.permute.xlu0 0
          %1099 = vperm.xlu0 %1098, %v1047
          %v1100 = vpop.permute.xlu0 %1099
          %v1102 = vlaneseq
          %v1103 = vshrl.u32 %v1102, 7
          %v1104 = vsub.s32 0, %v1103
          %v1105 = vrot.slane %v1100, %v1104
          %1106 = vset.pattern.permute.xlu0 0
          %1107 = vperm.xlu0 %1106, %v1049
          %v1108 = vpop.permute.xlu0 %1107
          %v1110 = vlaneseq
          %v1111 = vshrl.u32 %v1110, 7
          %v1112 = vsub.s32 0, %v1111
          %v1113 = vrot.slane %v1108, %v1112
          %v1114 = vmul.f32 %v992, %v1057
          %v1115 = vmul.f32 %v993, %v1065
          %v1116 = vmul.f32 %v994, %v1073
          %v1117 = vmul.f32 %v995, %v1081
          %v1118 = vmul.f32 %v996, %v1089
          %v1119 = vmul.f32 %v997, %v1097
          %v1120 = vmul.f32 %v998, %v1105
          %v1121 = vmul.f32 %v999, %v1113
          %vm1122 = vcmp.ge.f32.partialorder %v1114, 0.0
          %vm1123 = vcmp.ge.f32.partialorder %v1115, 0.0
          %vm1124 = vcmp.ge.f32.partialorder %v1116, 0.0
          %vm1125 = vcmp.ge.f32.partialorder %v1117, 0.0
          %vm1126 = vcmp.ge.f32.partialorder %v1118, 0.0
          %vm1127 = vcmp.ge.f32.partialorder %v1119, 0.0
          %vm1128 = vcmp.ge.f32.partialorder %v1120, 0.0
          %vm1129 = vcmp.ge.f32.partialorder %v1121, 0.0
          %v1130 = vmul.f32 %v1114, 0.2
          %v1131 = vmul.f32 %v1115, 0.2
          %v1132 = vmul.f32 %v1116, 0.2
          %v1133 = vmul.f32 %v1117, 0.2
          %v1134 = vmul.f32 %v1118, 0.2
          %v1135 = vmul.f32 %v1119, 0.2
          %v1136 = vmul.f32 %v1120, 0.2
          %v1137 = vmul.f32 %v1121, 0.2
          %v1138 = vsel %vm1122, %v1114, %v1130
          %v1139 = vsel %vm1123, %v1115, %v1131
          %v1140 = vsel %vm1124, %v1116, %v1132
          %v1141 = vsel %vm1125, %v1117, %v1133
          %v1142 = vsel %vm1126, %v1118, %v1134
          %v1143 = vsel %vm1127, %v1119, %v1135
          %v1144 = vsel %vm1128, %v1120, %v1136
          %v1145 = vsel %vm1129, %v1121, %v1137
          %1146 = vst.msk [vmem:[%s148] sm:$0x1] %vm834, %v1138
          %1147 = vst.msk [vmem:[%s148 + $0x1] sm:$0x1] %vm834, %v1139
          %1148 = vst.msk [vmem:[%s148 + $0x2] sm:$0x1] %vm834, %v1140
          %1149 = vst.msk [vmem:[%s148 + $0x3] sm:$0x1] %vm834, %v1141
          %1150 = vst.msk [vmem:[%s148 + $0x4] sm:$0x1] %vm834, %v1142
          %1151 = vst.msk [vmem:[%s148 + $0x5] sm:$0x1] %vm834, %v1143
          %1152 = vst.msk [vmem:[%s148 + $0x6] sm:$0x1] %vm834, %v1144
          %1153 = vst.msk [vmem:[%s148 + $0x7] sm:$0x1] %vm834, %v1145
        $region36: #{tpu_custom_call.1} parent=27 // pred_fallthru
          _
        %s1154 = sand.u32 %s83, 1
        %s1155 = scalar_lea.sflag [#allocation5], %s1154
        %s1156 = sand.u32 %s83, 1
        %s1157 = smul.addr %s1156, 8
        %s1158 = scalar_lea.vmem [#allocation4], %s1157
        // Predicated region
        $region37: #{tpu_custom_call.1} parent=27 // pred_check
          %p1159 = pneg %p93
        $region38: #{tpu_custom_call.1} parent=27 // pred_check_branch
          %1161 = sbr.rel (%p1159) target = $region40
        $region39: #{tpu_custom_call.1} parent=27 // pred_region
          %s1163 = ssub.s32 128, 128
          %1164 = vsyncadd %s1155, %s1163
          %s1165 = smul.addr %s20, 8
          %s1166 = smul.addr %s1165, 16
          %s1167 = scalar_lea.hbm %s2, %s1166
          %s1168 = sshll.u32 %s1158, 4
          %s1169 = int_to_ptr.vmem [resolvable:$true] %s1168
          %1174 = dma.vmem_to_hbm [thread:$0]  %s1169, 128, %s1167, %s1155, 16, 16, 1
        $region40: #{tpu_custom_call.1} parent=27 // pred_fallthru
          _
      $region28: #{tpu_custom_call.1} parent=5 // pred_fallthru
        _
      %p1175 = scmp.le.s32.totalorder 2, %s11
      // Predicated region
      $region41: #{tpu_custom_call.1} parent=5 // pred_check
        %p1176 = pneg %p1175
      $region42: #{tpu_custom_call.1} parent=5 // pred_check_branch
        %1178 = sbr.rel (%p1176) target = $region44
      $region43: #{tpu_custom_call.1} parent=5 // pred_region
        %s1179 = ssub.s32 %s11, 2
        // Predicated region
        $region45: #{tpu_custom_call.1} parent=43 // pred_check
          %p1180 = pneg %p99
        $region46: #{tpu_custom_call.1} parent=43 // pred_check_branch
          %1182 = sbr.rel (%p1180) target = $region48
        $region47: #{tpu_custom_call.1} parent=43 // pred_region
          %s1183 = sand.u32 %s84, 1
          %s1184 = scalar_lea.sflag [#allocation5], %s1183
          %s1185 = sand.u32 %s84, 1
          %s1186 = smul.addr %s1185, 8
          %s1187 = scalar_lea.vmem [#allocation4], %s1186
          %1188 = dma.done %s1184, 128
        $region48: #{tpu_custom_call.1} parent=43 // pred_fallthru
          _
      $region44: #{tpu_custom_call.1} parent=5 // pred_fallthru
        _
    $region6: #{tpu_custom_call.1} parent=1 // loop_footer
      %s15 = sadd.s32 1, %s11
    $region7: #{tpu_custom_call.1} parent=1 // loop_footer_branch
      %10 = sbr.rel target = $region3
    $region8: #{tpu_custom_call.1} parent=1 // loop_exit
      _
    %1189 = vsyncpa [#allocation5], 1
    %s1190 = scalar_lea.sflag [#allocation5], 1
    %1191 = vsyncpa %s1190, 1

</llo_original>
